<compile_context>
chip_gen: v7x
topology: tpu7x:2x2x1
jax: 0.10.0
libtpu: 0.0.40
codegen_flags: <defaults>
</compile_context>

<pallas_src>
import functools

import jax
import jax.numpy as jnp
from jax.experimental import pallas as pl
from jax.experimental.pallas import tpu as pltpu


def _round_up(x: int, m: int) -> int:
    return ((x + m - 1) // m) * m


def _mlp_fused_kernel(x_ref, w_in_ref, b_in_ref, w_hid_ref, b_hid_ref,
                      w_out_ref, b_out_ref, o_ref, h_ref,
                      *, num_hidden: int, compute_dtype):
    """Whole-MLP forward for one batch tile.

    x_ref:     (tb, In_p)                input dtype
    w_in_ref:  (In_p, H_p)               compute_dtype (pre-transposed)
    b_in_ref:  (1, H_p)                  f32
    w_hid_ref: (L, H_p, H_p)             compute_dtype (L >= 1; dummy if no hidden)
    b_hid_ref: (L, 1, H_p)               f32
    w_out_ref: (H_p, Out_p)              compute_dtype
    b_out_ref: (1, Out_p)                f32
    o_ref:     (tb, Out_p)               f32 output
    h_ref:     (tb, H_p)                 f32 VMEM scratch (inter-layer activation)
    """
    cd = compute_dtype

    # Layer 0: fc + ReLU.  f32 accumulation on the MXU, f32 epilogue.
    h = jnp.dot(x_ref[...].astype(cd), w_in_ref[...],
                preferred_element_type=jnp.float32)
    h_ref[...] = jnp.maximum(h + b_in_ref[...], 0.0)

    # Hidden layers: static unrolled loop, activation stays in VMEM scratch.
    for layer in range(num_hidden):
        h = jnp.dot(h_ref[...].astype(cd), w_hid_ref[layer],
                    preferred_element_type=jnp.float32)
        h_ref[...] = jnp.maximum(h + b_hid_ref[layer], 0.0)

    # Output layer: fc2, no ReLU.
    y = jnp.dot(h_ref[...].astype(cd), w_out_ref[...],
                preferred_element_type=jnp.float32)
    o_ref[...] = (y + b_out_ref[...]).astype(o_ref.dtype)


def mlp_pallas_forward(params, x, *, compute_dtype=jnp.float32):
    """Fused MLP forward.  params = ((w_in, b_in), [(w_h, b_h), ...], (w_out, b_out)),
    all weights stored pre-transposed as (fan_in, fan_out).  x: (B, in_dim) f32."""
    (w_in, b_in), hidden, (w_out, b_out) = params
    B, in_dim = x.shape
    hid_dim = w_in.shape[1]
    out_dim = w_out.shape[1]
    num_hidden = len(hidden)
    cd = jnp.dtype(compute_dtype)

    # Lane-dense padding: features -> multiple of 128 lanes, batch -> tile of >=8 sublanes.
    LANE = 128
    in_p = _round_up(in_dim, LANE)
    hid_p = _round_up(hid_dim, LANE)
    out_p = _round_up(out_dim, LANE)
    tb = min(128, _round_up(B, 8))
    b_p = _round_up(B, tb)

    def pad2(a, rows, cols, dtype):
        buf = jnp.zeros((rows, cols), dtype)
        return buf.at[:a.shape[0], :a.shape[1]].set(a.astype(dtype))

    x_p = pad2(x, b_p, in_p, x.dtype)
    w_in_p = pad2(w_in, in_p, hid_p, cd)
    b_in_p = pad2(b_in.reshape(1, -1), 1, hid_p, jnp.float32)
    w_out_p = pad2(w_out, hid_p, out_p, cd)
    b_out_p = pad2(b_out.reshape(1, -1), 1, out_p, jnp.float32)

    if num_hidden > 0:
        w_hid_p = jnp.stack([pad2(w, hid_p, hid_p, cd) for w, _ in hidden])
        b_hid_p = jnp.stack([pad2(b.reshape(1, -1), 1, hid_p, jnp.float32)
                             for _, b in hidden])
    else:
        # Dummy single entry; the kernel's static loop runs zero iterations.
        w_hid_p = jnp.zeros((1, hid_p, hid_p), cd)
        b_hid_p = jnp.zeros((1, 1, hid_p), jnp.float32)
    n_hid_stack = w_hid_p.shape[0]

    grid = (b_p // tb,)

    # VMEM budget with headroom (inputs are double-buffered by the pipeline),
    # capped to stay inside v7x's 64 MiB physical VMEM.
    # TODO(synk): for hid_dim large enough that the resident weights exceed this
    # budget, add K/N tiling per layer instead of whole-feature blocks.
    w_bytes = (in_p * hid_p + n_hid_stack * hid_p * hid_p + hid_p * out_p) * cd.itemsize
    b_bytes = (hid_p + n_hid_stack * hid_p + out_p) * 4
    act_bytes = tb * in_p * x.dtype.itemsize + tb * out_p * 4 + tb * hid_p * 4
    needed = 2 * (w_bytes + b_bytes + act_bytes)
    vmem_limit = int(min(64 * 1024 * 1024, max(2 * needed, 32 * 1024 * 1024)))

    kernel = functools.partial(_mlp_fused_kernel,
                               num_hidden=num_hidden, compute_dtype=cd)

    out_padded = pl.pallas_call(
        kernel,
        out_shape=jax.ShapeDtypeStruct((b_p, out_p), jnp.float32),
        grid_spec=pltpu.PrefetchScalarGridSpec(
            num_scalar_prefetch=0,
            grid=grid,
            in_specs=[
                pl.BlockSpec((tb, in_p), lambda i: (i, 0)),                    # x tile
                pl.BlockSpec((in_p, hid_p), lambda i: (0, 0)),                 # fc weight (resident)
                pl.BlockSpec((1, hid_p), lambda i: (0, 0)),                    # fc bias
                pl.BlockSpec((n_hid_stack, hid_p, hid_p), lambda i: (0, 0, 0)),  # hidden weights
                pl.BlockSpec((n_hid_stack, 1, hid_p), lambda i: (0, 0, 0)),      # hidden biases
                pl.BlockSpec((hid_p, out_p), lambda i: (0, 0)),                # fc2 weight
                pl.BlockSpec((1, out_p), lambda i: (0, 0)),                    # fc2 bias
            ],
            out_specs=pl.BlockSpec((tb, out_p), lambda i: (i, 0)),
            scratch_shapes=[pltpu.VMEM((tb, hid_p), jnp.float32)],
        ),
        compiler_params=pltpu.CompilerParams(
            dimension_semantics=("parallel",),   # batch tiles shard across v7x's 2 TCs
            vmem_limit_bytes=vmem_limit,
        ),
    )(x_p, w_in_p, b_in_p, w_hid_p, b_hid_p, w_out_p, b_out_p)

    return out_padded[:B, :out_dim]


class MLPPallas:
    """Pallas port of the PyTorch MLP module (act='relu')."""

    def __init__(self, in_dim, out_dim, hid_dim, n_layer, act, key,
                 compute_dtype=jnp.float32):
        assert act == "relu"
        self.in_dim, self.out_dim, self.hid_dim, self.n_layer = (
            in_dim, out_dim, hid_dim, n_layer)
        self.compute_dtype = compute_dtype

        def init_linear(k, fan_in, fan_out):
            # Deterministic init mimicking PyTorch's uniform(-1/sqrt(fan_in), ...).
            kw, kb = jax.random.split(k)
            bound = 1.0 / jnp.sqrt(fan_in)
            # Stored already transposed: (fan_in, fan_out).
            w_t = jax.random.uniform(kw, (fan_in, fan_out), jnp.float32,
                                     -bound, bound)
            b = jax.random.uniform(kb, (fan_out,), jnp.float32, -bound, bound)
            return w_t, b

        keys = jax.random.split(key, n_layer + 1)
        self.fc = init_linear(keys[0], in_dim, hid_dim)
        self.linears = [init_linear(keys[1 + i], hid_dim, hid_dim)
                        for i in range(n_layer - 1)]
        self.fc2 = init_linear(keys[n_layer], hid_dim, out_dim)

    @property
    def params(self):
        return (self.fc, self.linears, self.fc2)

    def __call__(self, x):
        return mlp_pallas_forward(self.params, x,
                                  compute_dtype=self.compute_dtype)


def mlp_reference(model: MLPPallas, x):
    """Pure-JAX f32 reference for correctness checking."""
    w_t, b = model.fc
    x = jnp.maximum(x @ w_t + b, 0.0)
    for w_t, b in model.linears:
        x = jnp.maximum(x @ w_t + b, 0.0)
    w_t, b = model.fc2
    return x @ w_t + b


if __name__ == "__main__":
    key = jax.random.PRNGKey(0)
    k_model, k_x = jax.random.split(key)

    batch, in_dim, hid_dim, out_dim, n_layer = 8, 16, 32, 8, 3
    model = MLPPallas(in_dim, out_dim, hid_dim, n_layer, "relu", k_model)

    x = jax.random.normal(k_x, (batch, in_dim), jnp.float32)

    # f32 matmul path: exact match with the reference.
    out = jax.block_until_ready(model(x))
    ref = mlp_reference(model, x)
    assert out.shape == (batch, out_dim)
    assert jnp.allclose(out, ref, atol=1e-5, rtol=1e-5)

    # bf16 matmul operands (MXU-native path) with f32 accumulation — looser
    # tolerance per bf16 rounding.
    out_bf16 = jax.block_until_ready(
        mlp_pallas_forward(model.params, x, compute_dtype=jnp.bfloat16))
    assert out_bf16.shape == (batch, out_dim)
    assert jnp.allclose(out_bf16, ref, atol=1e-1, rtol=1e-1)

    print("KERNEL_OK")
</pallas_src>

<mosaic_0001>
module attributes {stable_mosaic.version = 11 : i64} {
  func.func @_mlp_fused_kernel(%arg0: i32, %arg1: memref<8x128xf32, #tpu.memory_space<vmem>>, %arg2: memref<128x128xf32, #tpu.memory_space<vmem>>, %arg3: memref<1x128xf32, #tpu.memory_space<vmem>>, %arg4: memref<2x128x128xf32, #tpu.memory_space<vmem>>, %arg5: memref<2x1x128xf32, #tpu.memory_space<vmem>>, %arg6: memref<128x128xf32, #tpu.memory_space<vmem>>, %arg7: memref<1x128xf32, #tpu.memory_space<vmem>>, %arg8: memref<8x128xf32, #tpu.memory_space<vmem>>, %arg9: memref<8x128xf32, #tpu.memory_space<vmem>>) attributes {dimension_semantics = [#tpu.dimension_semantics<parallel>], iteration_bounds = array<i64: 1>, scalar_prefetch = 0 : i64, scratch_operands = 1 : i64, tpu.core_type = #tpu.core_type<tc>, window_params = [{transform_indices = @transform_0, window_bounds = array<i64: 8, 128>}, {pipeline_mode = #tpu.pipeline_mode<synchronous>, transform_indices = @transform_1, window_bounds = array<i64: 128, 128>}, {pipeline_mode = #tpu.pipeline_mode<synchronous>, transform_indices = @transform_2, window_bounds = array<i64: 1, 128>}, {pipeline_mode = #tpu.pipeline_mode<synchronous>, transform_indices = @transform_3, window_bounds = array<i64: 2, 128, 128>}, {pipeline_mode = #tpu.pipeline_mode<synchronous>, transform_indices = @transform_4, window_bounds = array<i64: 2, 1, 128>}, {pipeline_mode = #tpu.pipeline_mode<synchronous>, transform_indices = @transform_5, window_bounds = array<i64: 128, 128>}, {pipeline_mode = #tpu.pipeline_mode<synchronous>, transform_indices = @transform_6, window_bounds = array<i64: 1, 128>}, {transform_indices = @transform_7, window_bounds = array<i64: 8, 128>}]} {
    %c0 = arith.constant 0 : index
    %c0_0 = arith.constant 0 : index
    %0 = vector.load %arg1[%c0, %c0_0] : memref<8x128xf32, #tpu.memory_space<vmem>>, vector<8x128xf32>
    %c0_1 = arith.constant 0 : index
    %c0_2 = arith.constant 0 : index
    %1 = vector.load %arg2[%c0_1, %c0_2] : memref<128x128xf32, #tpu.memory_space<vmem>>, vector<128x128xf32>
    %cst = arith.constant dense<0.000000e+00> : vector<8x128xf32>
    %2 = tpu.matmul %0, %1, %cst {dimension_numbers = #tpu.dot_dimension_numbers<[1], [0], [0], [1], [0, 0, 1, 1], [], []>} : vector<8x128xf32>, vector<128x128xf32>, vector<8x128xf32> -> vector<8x128xf32>
    %c0_3 = arith.constant 0 : index
    %c0_4 = arith.constant 0 : index
    %3 = vector.load %arg3[%c0_3, %c0_4] : memref<1x128xf32, #tpu.memory_space<vmem>>, vector<1x128xf32>
    %4 = vector.broadcast %3 : vector<1x128xf32> to vector<8x128xf32>
    %5 = arith.addf %2, %4 : vector<8x128xf32>
    %cst_5 = arith.constant 0.000000e+00 : f32
    %6 = vector.broadcast %cst_5 : f32 to vector<8x128xf32>
    %7 = arith.maximumf %5, %6 : vector<8x128xf32>
    %c0_6 = arith.constant 0 : index
    %c0_7 = arith.constant 0 : index
    %8 = vector.load %arg9[%c0_6, %c0_7] : memref<8x128xf32, #tpu.memory_space<vmem>>, vector<8x128xf32>
    tpu.vector_store %arg9[%c0_6, %c0_7], %7 {strides = array<i32>} : memref<8x128xf32, #tpu.memory_space<vmem>>, vector<8x128xf32>,
    %c0_8 = arith.constant 0 : index
    %c0_9 = arith.constant 0 : index
    %9 = vector.load %arg9[%c0_8, %c0_9] : memref<8x128xf32, #tpu.memory_space<vmem>>, vector<8x128xf32>
    %c0_10 = arith.constant 0 : index
    %c0_11 = arith.constant 0 : index
    %c0_12 = arith.constant 0 : index
    %10 = vector.load %arg4[%c0_10, %c0_11, %c0_12] : memref<2x128x128xf32, #tpu.memory_space<vmem>>, vector<1x128x128xf32>
    %11 = vector.shape_cast %10 : vector<1x128x128xf32> to vector<128x128xf32>
    %cst_13 = arith.constant dense<0.000000e+00> : vector<8x128xf32>
    %12 = tpu.matmul %9, %11, %cst_13 {dimension_numbers = #tpu.dot_dimension_numbers<[1], [0], [0], [1], [0, 0, 1, 1], [], []>} : vector<8x128xf32>, vector<128x128xf32>, vector<8x128xf32> -> vector<8x128xf32>
    %c0_14 = arith.constant 0 : index
    %c0_15 = arith.constant 0 : index
    %c0_16 = arith.constant 0 : index
    %13 = vector.load %arg5[%c0_14, %c0_15, %c0_16] : memref<2x1x128xf32, #tpu.memory_space<vmem>>, vector<1x1x128xf32>
    %14 = vector.shape_cast %13 : vector<1x1x128xf32> to vector<1x128xf32>
    %15 = vector.broadcast %14 : vector<1x128xf32> to vector<8x128xf32>
    %16 = arith.addf %12, %15 : vector<8x128xf32>
    %cst_17 = arith.constant 0.000000e+00 : f32
    %17 = vector.broadcast %cst_17 : f32 to vector<8x128xf32>
    %18 = arith.maximumf %16, %17 : vector<8x128xf32>
    %c0_18 = arith.constant 0 : index
    %c0_19 = arith.constant 0 : index
    %19 = vector.load %arg9[%c0_18, %c0_19] : memref<8x128xf32, #tpu.memory_space<vmem>>, vector<8x128xf32>
    tpu.vector_store %arg9[%c0_18, %c0_19], %18 {strides = array<i32>} : memref<8x128xf32, #tpu.memory_space<vmem>>, vector<8x128xf32>,
    %c0_20 = arith.constant 0 : index
    %c0_21 = arith.constant 0 : index
    %20 = vector.load %arg9[%c0_20, %c0_21] : memref<8x128xf32, #tpu.memory_space<vmem>>, vector<8x128xf32>
    %c1 = arith.constant 1 : index
    %c0_22 = arith.constant 0 : index
    %c0_23 = arith.constant 0 : index
    %21 = vector.load %arg4[%c1, %c0_22, %c0_23] : memref<2x128x128xf32, #tpu.memory_space<vmem>>, vector<1x128x128xf32>
    %22 = vector.shape_cast %21 : vector<1x128x128xf32> to vector<128x128xf32>
    %cst_24 = arith.constant dense<0.000000e+00> : vector<8x128xf32>
    %23 = tpu.matmul %20, %22, %cst_24 {dimension_numbers = #tpu.dot_dimension_numbers<[1], [0], [0], [1], [0, 0, 1, 1], [], []>} : vector<8x128xf32>, vector<128x128xf32>, vector<8x128xf32> -> vector<8x128xf32>
    %c1_25 = arith.constant 1 : index
    %c0_26 = arith.constant 0 : index
    %c0_27 = arith.constant 0 : index
    %24 = vector.load %arg5[%c1_25, %c0_26, %c0_27] : memref<2x1x128xf32, #tpu.memory_space<vmem>>, vector<1x1x128xf32>
    %25 = vector.shape_cast %24 : vector<1x1x128xf32> to vector<1x128xf32>
    %26 = vector.broadcast %25 : vector<1x128xf32> to vector<8x128xf32>
    %27 = arith.addf %23, %26 : vector<8x128xf32>
    %cst_28 = arith.constant 0.000000e+00 : f32
    %28 = vector.broadcast %cst_28 : f32 to vector<8x128xf32>
    %29 = arith.maximumf %27, %28 : vector<8x128xf32>
    %c0_29 = arith.constant 0 : index
    %c0_30 = arith.constant 0 : index
    %30 = vector.load %arg9[%c0_29, %c0_30] : memref<8x128xf32, #tpu.memory_space<vmem>>, vector<8x128xf32>
    tpu.vector_store %arg9[%c0_29, %c0_30], %29 {strides = array<i32>} : memref<8x128xf32, #tpu.memory_space<vmem>>, vector<8x128xf32>,
    %c0_31 = arith.constant 0 : index
    %c0_32 = arith.constant 0 : index
    %31 = vector.load %arg9[%c0_31, %c0_32] : memref<8x128xf32, #tpu.memory_space<vmem>>, vector<8x128xf32>
    %c0_33 = arith.constant 0 : index
    %c0_34 = arith.constant 0 : index
    %32 = vector.load %arg6[%c0_33, %c0_34] : memref<128x128xf32, #tpu.memory_space<vmem>>, vector<128x128xf32>
    %cst_35 = arith.constant dense<0.000000e+00> : vector<8x128xf32>
    %33 = tpu.matmul %31, %32, %cst_35 {dimension_numbers = #tpu.dot_dimension_numbers<[1], [0], [0], [1], [0, 0, 1, 1], [], []>} : vector<8x128xf32>, vector<128x128xf32>, vector<8x128xf32> -> vector<8x128xf32>
    %c0_36 = arith.constant 0 : index
    %c0_37 = arith.constant 0 : index
    %34 = vector.load %arg7[%c0_36, %c0_37] : memref<1x128xf32, #tpu.memory_space<vmem>>, vector<1x128xf32>
    %35 = vector.broadcast %34 : vector<1x128xf32> to vector<8x128xf32>
    %36 = arith.addf %33, %35 : vector<8x128xf32>
    %c0_38 = arith.constant 0 : index
    %c0_39 = arith.constant 0 : index
    %37 = vector.load %arg8[%c0_38, %c0_39] : memref<8x128xf32, #tpu.memory_space<vmem>>, vector<8x128xf32>
    tpu.vector_store %arg8[%c0_38, %c0_39], %36 {strides = array<i32>} : memref<8x128xf32, #tpu.memory_space<vmem>>, vector<8x128xf32>,
    return
  }
  func.func @transform_0(%arg0: i32) -> (i32, i32) {
    %c0_i32 = arith.constant 0 : i32
    %c0_i32_0 = arith.constant 0 : i32
    return %arg0, %c0_i32 : i32, i32
  }
  func.func @transform_1(%arg0: i32) -> (i32, i32) {
    %c0_i32 = arith.constant 0 : i32
    %c0_i32_0 = arith.constant 0 : i32
    %c0_i32_1 = arith.constant 0 : i32
    return %c0_i32, %c0_i32_0 : i32, i32
  }
  func.func @transform_2(%arg0: i32) -> (i32, i32) {
    %c0_i32 = arith.constant 0 : i32
    %c0_i32_0 = arith.constant 0 : i32
    %c0_i32_1 = arith.constant 0 : i32
    return %c0_i32, %c0_i32_0 : i32, i32
  }
  func.func @transform_3(%arg0: i32) -> (i32, i32, i32) {
    %c0_i32 = arith.constant 0 : i32
    %c0_i32_0 = arith.constant 0 : i32
    %c0_i32_1 = arith.constant 0 : i32
    %c0_i32_2 = arith.constant 0 : i32
    return %c0_i32, %c0_i32_0, %c0_i32_1 : i32, i32, i32
  }
  func.func @transform_4(%arg0: i32) -> (i32, i32, i32) {
    %c0_i32 = arith.constant 0 : i32
    %c0_i32_0 = arith.constant 0 : i32
    %c0_i32_1 = arith.constant 0 : i32
    %c0_i32_2 = arith.constant 0 : i32
    return %c0_i32, %c0_i32_0, %c0_i32_1 : i32, i32, i32
  }
  func.func @transform_5(%arg0: i32) -> (i32, i32) {
    %c0_i32 = arith.constant 0 : i32
    %c0_i32_0 = arith.constant 0 : i32
    %c0_i32_1 = arith.constant 0 : i32
    return %c0_i32, %c0_i32_0 : i32, i32
  }
  func.func @transform_6(%arg0: i32) -> (i32, i32) {
    %c0_i32 = arith.constant 0 : i32
    %c0_i32_0 = arith.constant 0 : i32
    %c0_i32_1 = arith.constant 0 : i32
    return %c0_i32, %c0_i32_0 : i32, i32
  }
  func.func @transform_7(%arg0: i32) -> (i32, i32) {
    %c0_i32 = arith.constant 0 : i32
    %c0_i32_0 = arith.constant 0 : i32
    return %arg0, %c0_i32 : i32, i32
  }
}

</mosaic_0001>

<llo_original>
// kernel: tpu_custom_call.1
$region0: #{tpu_custom_call.1}
  #allocation0 [shape = 'u32[]', space=smem, size = 0x4, offset = 0x4, fixed_abs, tag = 'smem constant byte address 0x4 - core index']
  #allocation1 [shape = 'u32[144,128]{1,0:T(1,128)}', space=vmem, size = 0x12000, scoped, tag = 'internal scratch']
  #allocation2 [shape = 'f32[8,128]{1,0:T(8,128)}', space=vmem, size = 0x1000, scoped, tag = 'scratch operand']
  %s0 = inlined_call_operand.hbm [shape: f32[8,128], index: 0, kind: input, shape index: {}]
  %s1 = inlined_call_operand.hbm [shape: f32[128,128], index: 1, kind: input, shape index: {}]
  %s2 = inlined_call_operand.vmem [shape: f32[1,128], index: 2, kind: input, shape index: {}]
  %s3 = inlined_call_operand.hbm [shape: f32[2,128,128], index: 3, kind: input, shape index: {}]
  %s4 = inlined_call_operand.vmem [shape: f32[2,1,128], index: 4, kind: input, shape index: {}]
  %s5 = inlined_call_operand.hbm [shape: f32[128,128], index: 5, kind: input, shape index: {}]
  %s6 = inlined_call_operand.vmem [shape: f32[1,128], index: 6, kind: input, shape index: {}]
  %s7 = inlined_call_operand.hbm [shape: f32[8,128], index: 7, kind: output, shape index: {}]
  %s8 = sld [smem:[#allocation0]]
  $region54: #{tpu_custom_call.1} parent=0
    _
  %s10 = ssub.s32 1, %s8
  %s11 = scalar_select 0, %s10, %s8
  $region1: #{tpu_custom_call.1} parent=0
    #allocation3 [shape = 'u8[4096]{0}', space=vmem, size = 0x1000, scoped, tag = 'input window, operand 0, single buffered']
    #allocation4 [shape = 's32[1]{0}', space=sflag, size = 0x4, scoped, tag = 'scoped memory for tpu_custom_call.1']
    #allocation5 [shape = 's32[1]{0}', space=sflag, size = 0x4, scoped, tag = 'scoped memory for tpu_custom_call.1']
    #allocation6 [shape = 'u8[65536]{0}', space=vmem, size = 0x10000, scoped, tag = 'input window, operand 1, single buffered']
    #allocation7 [shape = 's32[1]{0}', space=sflag, size = 0x4, scoped, tag = 'scoped memory for tpu_custom_call.1']
    #allocation8 [shape = 'u8[131072]{0}', space=vmem, size = 0x20000, scoped, tag = 'input window, operand 3, single buffered']
    #allocation9 [shape = 'u8[65536]{0}', space=vmem, size = 0x10000, scoped, tag = 'input window, operand 5, single buffered']
    #allocation10 [shape = 's32[1]{0}', space=sflag, size = 0x4, scoped, tag = 'scoped memory for tpu_custom_call.1']
    #allocation11 [shape = 'u8[4096]{0}', space=vmem, size = 0x1000, scoped, tag = 'output window, operand 0, single buffered']
    %12 = vsyncpa [#allocation4], 0
    %13 = vsyncpa [#allocation7], 0
    %14 = vsyncpa [#allocation10], 0
    %15 = vsyncpa [#allocation5], 0
    // Predicated region
    $region2: #{tpu_custom_call.1} parent=1 // pred_check
      _
    $region3: #{tpu_custom_call.1} parent=1 // pred_check_branch
      %17 = sbr.rel (0) target = $region5
    $region4: #{tpu_custom_call.1} parent=1 // pred_region
      %s19 = ssub.s32 128, 128
      %20 = vsyncadd [#allocation4], %s19
      %s22 = sshll.u32 [#allocation3], 4
      %s23 = int_to_ptr.vmem [resolvable:$true] %s22
      %25 = dma.hbm_to_vmem [thread:$0]  %s0, 128, %s23, [#allocation4]
    $region5: #{tpu_custom_call.1} parent=1 // pred_fallthru
      _
    // Predicated region
    $region6: #{tpu_custom_call.1} parent=1 // pred_check
      _
    $region7: #{tpu_custom_call.1} parent=1 // pred_check_branch
      %27 = sbr.rel (0) target = $region9
    $region8: #{tpu_custom_call.1} parent=1 // pred_region
      %s29 = ssub.s32 2048, 2048
      %30 = vsyncadd [#allocation7], %s29
      %s31 = sshll.u32 [#allocation6], 4
      %s32 = int_to_ptr.vmem [resolvable:$true] %s31
      %37 = dma.hbm_to_vmem [thread:$0]  %s1, 2048, %s32, [#allocation7], 128, 128, 8
    $region9: #{tpu_custom_call.1} parent=1 // pred_fallthru
      _
    // Predicated region
    $region10: #{tpu_custom_call.1} parent=1 // pred_check
      _
    $region11: #{tpu_custom_call.1} parent=1 // pred_check_branch
      %39 = sbr.rel (0) target = $region13
    $region12: #{tpu_custom_call.1} parent=1 // pred_region
      _
    $region13: #{tpu_custom_call.1} parent=1 // pred_fallthru
      _
    // Predicated region
    $region14: #{tpu_custom_call.1} parent=1 // pred_check
      _
    $region15: #{tpu_custom_call.1} parent=1 // pred_check_branch
      %41 = sbr.rel (0) target = $region17
    $region16: #{tpu_custom_call.1} parent=1 // pred_region
      %s43 = ssub.s32 4096, 4096
      %44 = vsyncadd [#allocation7], %s43
      %s45 = sshll.u32 [#allocation8], 4
      %s46 = int_to_ptr.vmem [resolvable:$true] %s45
      %51 = dma.hbm_to_vmem [thread:$0]  %s3, 4096, %s46, [#allocation7], 128, 128, 8
    $region17: #{tpu_custom_call.1} parent=1 // pred_fallthru
      _
    // Predicated region
    $region18: #{tpu_custom_call.1} parent=1 // pred_check
      _
    $region19: #{tpu_custom_call.1} parent=1 // pred_check_branch
      %53 = sbr.rel (0) target = $region21
    $region20: #{tpu_custom_call.1} parent=1 // pred_region
      _
    $region21: #{tpu_custom_call.1} parent=1 // pred_fallthru
      _
    // Predicated region
    $region22: #{tpu_custom_call.1} parent=1 // pred_check
      _
    $region23: #{tpu_custom_call.1} parent=1 // pred_check_branch
      %55 = sbr.rel (0) target = $region25
    $region24: #{tpu_custom_call.1} parent=1 // pred_region
      %s57 = ssub.s32 2048, 2048
      %58 = vsyncadd [#allocation10], %s57
      %s59 = sshll.u32 [#allocation9], 4
      %s60 = int_to_ptr.vmem [resolvable:$true] %s59
      %65 = dma.hbm_to_vmem [thread:$0]  %s5, 2048, %s60, [#allocation10], 128, 128, 8
    $region25: #{tpu_custom_call.1} parent=1 // pred_fallthru
      _
    // Predicated region
    $region26: #{tpu_custom_call.1} parent=1 // pred_check
      _
    $region27: #{tpu_custom_call.1} parent=1 // pred_check_branch
      %67 = sbr.rel (0) target = $region29
    $region28: #{tpu_custom_call.1} parent=1 // pred_region
      _
    $region29: #{tpu_custom_call.1} parent=1 // pred_fallthru
      _
    // Predicated region
    $region30: #{tpu_custom_call.1} parent=1 // pred_check
      _
    $region31: #{tpu_custom_call.1} parent=1 // pred_check_branch
      %69 = sbr.rel (0) target = $region33
    $region32: #{tpu_custom_call.1} parent=1 // pred_region
      %70 = dma.done [#allocation4], 128
    $region33: #{tpu_custom_call.1} parent=1 // pred_fallthru
      _
    // Predicated region
    $region34: #{tpu_custom_call.1} parent=1 // pred_check
      _
    $region35: #{tpu_custom_call.1} parent=1 // pred_check_branch
      %72 = sbr.rel (0) target = $region37
    $region36: #{tpu_custom_call.1} parent=1 // pred_region
      %73 = dma.done [#allocation7], 2048
    $region37: #{tpu_custom_call.1} parent=1 // pred_fallthru
      _
    // Predicated region
    $region38: #{tpu_custom_call.1} parent=1 // pred_check
      _
    $region39: #{tpu_custom_call.1} parent=1 // pred_check_branch
      %75 = sbr.rel (0) target = $region41
    $region40: #{tpu_custom_call.1} parent=1 // pred_region
      %76 = dma.done [#allocation7], 4096
    $region41: #{tpu_custom_call.1} parent=1 // pred_fallthru
      _
    // Predicated region
    $region42: #{tpu_custom_call.1} parent=1 // pred_check
      _
    $region43: #{tpu_custom_call.1} parent=1 // pred_check_branch
      %78 = sbr.rel (0) target = $region45
    $region44: #{tpu_custom_call.1} parent=1 // pred_region
      %79 = dma.done [#allocation10], 2048
    $region45: #{tpu_custom_call.1} parent=1 // pred_fallthru
      _
    %v80 = vld [vmem:[#allocation3] sm:$0xff]
    %v81 = vld [vmem:[#allocation6] sm:$0xff]
    %v82 = vld [vmem:[#allocation6 + $0x8] sm:$0xff]
    %v83 = vld [vmem:[#allocation6 + $0x10] sm:$0xff]
    %v84 = vld [vmem:[#allocation6 + $0x18] sm:$0xff]
    %v85 = vld [vmem:[#allocation6 + $0x20] sm:$0xff]
    %v86 = vld [vmem:[#allocation6 + $0x28] sm:$0xff]
    %v87 = vld [vmem:[#allocation6 + $0x30] sm:$0xff]
    %v88 = vld [vmem:[#allocation6 + $0x38] sm:$0xff]
    %v89 = vld [vmem:[#allocation6 + $0x40] sm:$0xff]
    %v90 = vld [vmem:[#allocation6 + $0x48] sm:$0xff]
    %v91 = vld [vmem:[#allocation6 + $0x50] sm:$0xff]
    %v92 = vld [vmem:[#allocation6 + $0x58] sm:$0xff]
    %v93 = vld [vmem:[#allocation6 + $0x60] sm:$0xff]
    %v94 = vld [vmem:[#allocation6 + $0x68] sm:$0xff]
    %v95 = vld [vmem:[#allocation6 + $0x70] sm:$0xff]
    %v96 = vld [vmem:[#allocation6 + $0x78] sm:$0xff]
    %v97 = vld [vmem:[%s2] sm:$0x1]
    %v99 = vlaneseq
    %v100 = vshrl.u32 %v99, 7
    %v101 = vsub.s32 0, %v100
    %v102 = vrot.slane %v97, %v101
    %104 = vmatprep.subr.mxu0 0.0
    %105 = vmatpush1.msra.mxu0 %v81
    %106 = vmatprep.subr.mxu0 0.0
    %107 = vmatpush1.msra.mxu0 %v82
    %108 = vmatprep.subr.mxu0 0.0
    %109 = vmatpush1.msra.mxu0 %v83
    %110 = vmatprep.subr.mxu0 0.0
    %111 = vmatpush1.msra.mxu0 %v84
    %112 = vmatprep.subr.mxu0 0.0
    %113 = vmatpush1.msra.mxu0 %v85
    %114 = vmatprep.subr.mxu0 0.0
    %115 = vmatpush1.msra.mxu0 %v86
    %116 = vmatprep.subr.mxu0 0.0
    %117 = vmatpush1.msra.mxu0 %v87
    %118 = vmatprep.subr.mxu0 0.0
    %119 = vmatpush1.msra.mxu0 %v88
    %120 = vmatprep.subr.mxu0 0.0
    %121 = vmatpush1.msra.mxu0 %v89
    %122 = vmatprep.subr.mxu0 0.0
    %123 = vmatpush1.msra.mxu0 %v90
    %124 = vmatprep.subr.mxu0 0.0
    %125 = vmatpush1.msra.mxu0 %v91
    %126 = vmatprep.subr.mxu0 0.0
    %127 = vmatpush1.msra.mxu0 %v92
    %128 = vmatprep.subr.mxu0 0.0
    %129 = vmatpush1.msra.mxu0 %v93
    %130 = vmatprep.subr.mxu0 0.0
    %131 = vmatpush1.msra.mxu0 %v94
    %132 = vmatprep.subr.mxu0 0.0
    %133 = vmatpush1.msra.mxu0 %v95
    %134 = vmatprep.subr.mxu0 0.0
    %135 = vmatpush1.msra.mxu0 %v96
    %136 = vmatprep.subr.mxu0 0.0
    %137 = vmatpush1.msra.mxu0 0.0
    %138 = vmatprep.subr.mxu0 0.0
    %139 = vmatpush1.msra.mxu0 0.0
    %140 = vmatprep.subr.mxu0 0.0
    %141 = vmatpush1.msra.mxu0 0.0
    %142 = vmatprep.subr.mxu0 0.0
    %143 = vmatpush1.msra.mxu0 0.0
    %144 = vmatprep.subr.mxu0 0.0
    %145 = vmatpush1.msra.mxu0 0.0
    %146 = vmatprep.subr.mxu0 0.0
    %147 = vmatpush1.msra.mxu0 0.0
    %148 = vmatprep.subr.mxu0 0.0
    %149 = vmatpush1.msra.mxu0 0.0
    %150 = vmatprep.subr.mxu0 0.0
    %151 = vmatpush1.msra.mxu0 0.0
    %152 = vmatprep.subr.mxu0 0.0
    %153 = vmatpush1.msra.mxu0 0.0
    %154 = vmatprep.subr.mxu0 0.0
    %155 = vmatpush1.msra.mxu0 0.0
    %156 = vmatprep.subr.mxu0 0.0
    %157 = vmatpush1.msra.mxu0 0.0
    %158 = vmatprep.subr.mxu0 0.0
    %159 = vmatpush1.msra.mxu0 0.0
    %160 = vmatprep.subr.mxu0 0.0
    %161 = vmatpush1.msra.mxu0 0.0
    %162 = vmatprep.subr.mxu0 0.0
    %163 = vmatpush1.msra.mxu0 0.0
    %164 = vmatprep.subr.mxu0 0.0
    %165 = vmatpush1.msra.mxu0 0.0
    %166 = vmatprep.subr.mxu0 0.0
    %167 = vmatpush1.msra.mxu0 0.0
    %168 = vmatprep.mubr.f32.mxu0 0.0
    %169 = vmatmul.mubr.f32.gmra.mrb[0].mxu0 %v80
    %v170 = vpop.f32.mrb[0].mxu0
    %v171 = vadd.f32 %v102, %v170
    %v172 = vpop.f32.mrb[0].mxu0
    %173 = vdwg.mxu0
    %v174 = vmax.f32 %v171, 0.0
    %175 = vst [vmem:[#allocation2] sm:$0xff] %v174
    %v176 = vld [vmem:[#allocation2] sm:$0xff]
    %v177 = vld [vmem:[#allocation8] sm:$0xff]
    %v178 = vld [vmem:[#allocation8 + $0x8] sm:$0xff]
    %v179 = vld [vmem:[#allocation8 + $0x10] sm:$0xff]
    %v180 = vld [vmem:[#allocation8 + $0x18] sm:$0xff]
    %v181 = vld [vmem:[#allocation8 + $0x20] sm:$0xff]
    %v182 = vld [vmem:[#allocation8 + $0x28] sm:$0xff]
    %v183 = vld [vmem:[#allocation8 + $0x30] sm:$0xff]
    %v184 = vld [vmem:[#allocation8 + $0x38] sm:$0xff]
    %v185 = vld [vmem:[#allocation8 + $0x40] sm:$0xff]
    %v186 = vld [vmem:[#allocation8 + $0x48] sm:$0xff]
    %v187 = vld [vmem:[#allocation8 + $0x50] sm:$0xff]
    %v188 = vld [vmem:[#allocation8 + $0x58] sm:$0xff]
    %v189 = vld [vmem:[#allocation8 + $0x60] sm:$0xff]
    %v190 = vld [vmem:[#allocation8 + $0x68] sm:$0xff]
    %v191 = vld [vmem:[#allocation8 + $0x70] sm:$0xff]
    %v192 = vld [vmem:[#allocation8 + $0x78] sm:$0xff]
    %v193 = vld [vmem:[%s4] sm:$0x1]
    %v195 = vlaneseq
    %v196 = vshrl.u32 %v195, 7
    %v197 = vsub.s32 0, %v196
    %v198 = vrot.slane %v193, %v197
    %200 = vmatprep.subr.mxu0 0.0
    %201 = vmatpush1.msra.mxu0 %v177
    %202 = vmatprep.subr.mxu0 0.0
    %203 = vmatpush1.msra.mxu0 %v178
    %204 = vmatprep.subr.mxu0 0.0
    %205 = vmatpush1.msra.mxu0 %v179
    %206 = vmatprep.subr.mxu0 0.0
    %207 = vmatpush1.msra.mxu0 %v180
    %208 = vmatprep.subr.mxu0 0.0
    %209 = vmatpush1.msra.mxu0 %v181
    %210 = vmatprep.subr.mxu0 0.0
    %211 = vmatpush1.msra.mxu0 %v182
    %212 = vmatprep.subr.mxu0 0.0
    %213 = vmatpush1.msra.mxu0 %v183
    %214 = vmatprep.subr.mxu0 0.0
    %215 = vmatpush1.msra.mxu0 %v184
    %216 = vmatprep.subr.mxu0 0.0
    %217 = vmatpush1.msra.mxu0 %v185
    %218 = vmatprep.subr.mxu0 0.0
    %219 = vmatpush1.msra.mxu0 %v186
    %220 = vmatprep.subr.mxu0 0.0
    %221 = vmatpush1.msra.mxu0 %v187
    %222 = vmatprep.subr.mxu0 0.0
    %223 = vmatpush1.msra.mxu0 %v188
    %224 = vmatprep.subr.mxu0 0.0
    %225 = vmatpush1.msra.mxu0 %v189
    %226 = vmatprep.subr.mxu0 0.0
    %227 = vmatpush1.msra.mxu0 %v190
    %228 = vmatprep.subr.mxu0 0.0
    %229 = vmatpush1.msra.mxu0 %v191
    %230 = vmatprep.subr.mxu0 0.0
    %231 = vmatpush1.msra.mxu0 %v192
    %232 = vmatprep.subr.mxu0 0.0
    %233 = vmatpush1.msra.mxu0 0.0
    %234 = vmatprep.subr.mxu0 0.0
    %235 = vmatpush1.msra.mxu0 0.0
    %236 = vmatprep.subr.mxu0 0.0
    %237 = vmatpush1.msra.mxu0 0.0
    %238 = vmatprep.subr.mxu0 0.0
    %239 = vmatpush1.msra.mxu0 0.0
    %240 = vmatprep.subr.mxu0 0.0
    %241 = vmatpush1.msra.mxu0 0.0
    %242 = vmatprep.subr.mxu0 0.0
    %243 = vmatpush1.msra.mxu0 0.0
    %244 = vmatprep.subr.mxu0 0.0
    %245 = vmatpush1.msra.mxu0 0.0
    %246 = vmatprep.subr.mxu0 0.0
    %247 = vmatpush1.msra.mxu0 0.0
    %248 = vmatprep.subr.mxu0 0.0
    %249 = vmatpush1.msra.mxu0 0.0
    %250 = vmatprep.subr.mxu0 0.0
    %251 = vmatpush1.msra.mxu0 0.0
    %252 = vmatprep.subr.mxu0 0.0
    %253 = vmatpush1.msra.mxu0 0.0
    %254 = vmatprep.subr.mxu0 0.0
    %255 = vmatpush1.msra.mxu0 0.0
    %256 = vmatprep.subr.mxu0 0.0
    %257 = vmatpush1.msra.mxu0 0.0
    %258 = vmatprep.subr.mxu0 0.0
    %259 = vmatpush1.msra.mxu0 0.0
    %260 = vmatprep.subr.mxu0 0.0
    %261 = vmatpush1.msra.mxu0 0.0
    %262 = vmatprep.subr.mxu0 0.0
    %263 = vmatpush1.msra.mxu0 0.0
    %264 = vmatprep.mubr.f32.mxu0 0.0
    %265 = vmatmul.mubr.f32.gmra.mrb[0].mxu0 %v176
    %v266 = vpop.f32.mrb[0].mxu0
    %v267 = vadd.f32 %v198, %v266
    %v268 = vpop.f32.mrb[0].mxu0
    %269 = vdwg.mxu0
    %v270 = vmax.f32 %v267, 0.0
    %271 = vst [vmem:[#allocation2] sm:$0xff] %v270
    %v272 = vld [vmem:[#allocation2] sm:$0xff]
    %s273 = scalar_lea.vmem [#allocation8], 128
    %v274 = vld [vmem:[%s273] sm:$0xff]
    %v275 = vld [vmem:[%s273 + $0x8] sm:$0xff]
    %v276 = vld [vmem:[%s273 + $0x10] sm:$0xff]
    %v277 = vld [vmem:[%s273 + $0x18] sm:$0xff]
    %v278 = vld [vmem:[%s273 + $0x20] sm:$0xff]
    %v279 = vld [vmem:[%s273 + $0x28] sm:$0xff]
    %v280 = vld [vmem:[%s273 + $0x30] sm:$0xff]
    %v281 = vld [vmem:[%s273 + $0x38] sm:$0xff]
    %v282 = vld [vmem:[%s273 + $0x40] sm:$0xff]
    %v283 = vld [vmem:[%s273 + $0x48] sm:$0xff]
    %v284 = vld [vmem:[%s273 + $0x50] sm:$0xff]
    %v285 = vld [vmem:[%s273 + $0x58] sm:$0xff]
    %v286 = vld [vmem:[%s273 + $0x60] sm:$0xff]
    %v287 = vld [vmem:[%s273 + $0x68] sm:$0xff]
    %v288 = vld [vmem:[%s273 + $0x70] sm:$0xff]
    %v289 = vld [vmem:[%s273 + $0x78] sm:$0xff]
    %s290 = scalar_lea.vmem %s4, 1
    %v291 = vld [vmem:[%s290] sm:$0x1]
    %v293 = vlaneseq
    %v294 = vshrl.u32 %v293, 7
    %v295 = vsub.s32 0, %v294
    %v296 = vrot.slane %v291, %v295
    %298 = vmatprep.subr.mxu0 0.0
    %299 = vmatpush1.msra.mxu0 %v274
    %300 = vmatprep.subr.mxu0 0.0
    %301 = vmatpush1.msra.mxu0 %v275
    %302 = vmatprep.subr.mxu0 0.0
    %303 = vmatpush1.msra.mxu0 %v276
    %304 = vmatprep.subr.mxu0 0.0
    %305 = vmatpush1.msra.mxu0 %v277
    %306 = vmatprep.subr.mxu0 0.0
    %307 = vmatpush1.msra.mxu0 %v278
    %308 = vmatprep.subr.mxu0 0.0
    %309 = vmatpush1.msra.mxu0 %v279
    %310 = vmatprep.subr.mxu0 0.0
    %311 = vmatpush1.msra.mxu0 %v280
    %312 = vmatprep.subr.mxu0 0.0
    %313 = vmatpush1.msra.mxu0 %v281
    %314 = vmatprep.subr.mxu0 0.0
    %315 = vmatpush1.msra.mxu0 %v282
    %316 = vmatprep.subr.mxu0 0.0
    %317 = vmatpush1.msra.mxu0 %v283
    %318 = vmatprep.subr.mxu0 0.0
    %319 = vmatpush1.msra.mxu0 %v284
    %320 = vmatprep.subr.mxu0 0.0
    %321 = vmatpush1.msra.mxu0 %v285
    %322 = vmatprep.subr.mxu0 0.0
    %323 = vmatpush1.msra.mxu0 %v286
    %324 = vmatprep.subr.mxu0 0.0
    %325 = vmatpush1.msra.mxu0 %v287
    %326 = vmatprep.subr.mxu0 0.0
    %327 = vmatpush1.msra.mxu0 %v288
    %328 = vmatprep.subr.mxu0 0.0
    %329 = vmatpush1.msra.mxu0 %v289
    %330 = vmatprep.subr.mxu0 0.0
    %331 = vmatpush1.msra.mxu0 0.0
    %332 = vmatprep.subr.mxu0 0.0
    %333 = vmatpush1.msra.mxu0 0.0
    %334 = vmatprep.subr.mxu0 0.0
    %335 = vmatpush1.msra.mxu0 0.0
    %336 = vmatprep.subr.mxu0 0.0
    %337 = vmatpush1.msra.mxu0 0.0
    %338 = vmatprep.subr.mxu0 0.0
    %339 = vmatpush1.msra.mxu0 0.0
    %340 = vmatprep.subr.mxu0 0.0
    %341 = vmatpush1.msra.mxu0 0.0
    %342 = vmatprep.subr.mxu0 0.0
    %343 = vmatpush1.msra.mxu0 0.0
    %344 = vmatprep.subr.mxu0 0.0
    %345 = vmatpush1.msra.mxu0 0.0
    %346 = vmatprep.subr.mxu0 0.0
    %347 = vmatpush1.msra.mxu0 0.0
    %348 = vmatprep.subr.mxu0 0.0
    %349 = vmatpush1.msra.mxu0 0.0
    %350 = vmatprep.subr.mxu0 0.0
    %351 = vmatpush1.msra.mxu0 0.0
    %352 = vmatprep.subr.mxu0 0.0
    %353 = vmatpush1.msra.mxu0 0.0
    %354 = vmatprep.subr.mxu0 0.0
    %355 = vmatpush1.msra.mxu0 0.0
    %356 = vmatprep.subr.mxu0 0.0
    %357 = vmatpush1.msra.mxu0 0.0
    %358 = vmatprep.subr.mxu0 0.0
    %359 = vmatpush1.msra.mxu0 0.0
    %360 = vmatprep.subr.mxu0 0.0
    %361 = vmatpush1.msra.mxu0 0.0
    %362 = vmatprep.mubr.f32.mxu0 0.0
    %363 = vmatmul.mubr.f32.gmra.mrb[0].mxu0 %v272
    %v364 = vpop.f32.mrb[0].mxu0
    %v365 = vadd.f32 %v296, %v364
    %v366 = vpop.f32.mrb[0].mxu0
    %367 = vdwg.mxu0
    %v368 = vmax.f32 %v365, 0.0
    %369 = vst [vmem:[#allocation2] sm:$0xff] %v368
    %v370 = vld [vmem:[#allocation2] sm:$0xff]
    %v371 = vld [vmem:[#allocation9] sm:$0xff]
    %v372 = vld [vmem:[#allocation9 + $0x8] sm:$0xff]
    %v373 = vld [vmem:[#allocation9 + $0x10] sm:$0xff]
    %v374 = vld [vmem:[#allocation9 + $0x18] sm:$0xff]
    %v375 = vld [vmem:[#allocation9 + $0x20] sm:$0xff]
    %v376 = vld [vmem:[#allocation9 + $0x28] sm:$0xff]
    %v377 = vld [vmem:[#allocation9 + $0x30] sm:$0xff]
    %v378 = vld [vmem:[#allocation9 + $0x38] sm:$0xff]
    %v379 = vld [vmem:[#allocation9 + $0x40] sm:$0xff]
    %v380 = vld [vmem:[#allocation9 + $0x48] sm:$0xff]
    %v381 = vld [vmem:[#allocation9 + $0x50] sm:$0xff]
    %v382 = vld [vmem:[#allocation9 + $0x58] sm:$0xff]
    %v383 = vld [vmem:[#allocation9 + $0x60] sm:$0xff]
    %v384 = vld [vmem:[#allocation9 + $0x68] sm:$0xff]
    %v385 = vld [vmem:[#allocation9 + $0x70] sm:$0xff]
    %v386 = vld [vmem:[#allocation9 + $0x78] sm:$0xff]
    %v387 = vld [vmem:[%s6] sm:$0x1]
    %v389 = vlaneseq
    %v390 = vshrl.u32 %v389, 7
    %v391 = vsub.s32 0, %v390
    %v392 = vrot.slane %v387, %v391
    %394 = vmatprep.subr.mxu0 0.0
    %395 = vmatpush1.msra.mxu0 %v371
    %396 = vmatprep.subr.mxu0 0.0
    %397 = vmatpush1.msra.mxu0 %v372
    %398 = vmatprep.subr.mxu0 0.0
    %399 = vmatpush1.msra.mxu0 %v373
    %400 = vmatprep.subr.mxu0 0.0
    %401 = vmatpush1.msra.mxu0 %v374
    %402 = vmatprep.subr.mxu0 0.0
    %403 = vmatpush1.msra.mxu0 %v375
    %404 = vmatprep.subr.mxu0 0.0
    %405 = vmatpush1.msra.mxu0 %v376
    %406 = vmatprep.subr.mxu0 0.0
    %407 = vmatpush1.msra.mxu0 %v377
    %408 = vmatprep.subr.mxu0 0.0
    %409 = vmatpush1.msra.mxu0 %v378
    %410 = vmatprep.subr.mxu0 0.0
    %411 = vmatpush1.msra.mxu0 %v379
    %412 = vmatprep.subr.mxu0 0.0
    %413 = vmatpush1.msra.mxu0 %v380
    %414 = vmatprep.subr.mxu0 0.0
    %415 = vmatpush1.msra.mxu0 %v381
    %416 = vmatprep.subr.mxu0 0.0
    %417 = vmatpush1.msra.mxu0 %v382
    %418 = vmatprep.subr.mxu0 0.0
    %419 = vmatpush1.msra.mxu0 %v383
    %420 = vmatprep.subr.mxu0 0.0
    %421 = vmatpush1.msra.mxu0 %v384
    %422 = vmatprep.subr.mxu0 0.0
    %423 = vmatpush1.msra.mxu0 %v385
    %424 = vmatprep.subr.mxu0 0.0
    %425 = vmatpush1.msra.mxu0 %v386
    %426 = vmatprep.subr.mxu0 0.0
    %427 = vmatpush1.msra.mxu0 0.0
    %428 = vmatprep.subr.mxu0 0.0
    %429 = vmatpush1.msra.mxu0 0.0
    %430 = vmatprep.subr.mxu0 0.0
    %431 = vmatpush1.msra.mxu0 0.0
    %432 = vmatprep.subr.mxu0 0.0
    %433 = vmatpush1.msra.mxu0 0.0
    %434 = vmatprep.subr.mxu0 0.0
    %435 = vmatpush1.msra.mxu0 0.0
    %436 = vmatprep.subr.mxu0 0.0
    %437 = vmatpush1.msra.mxu0 0.0
    %438 = vmatprep.subr.mxu0 0.0
    %439 = vmatpush1.msra.mxu0 0.0
    %440 = vmatprep.subr.mxu0 0.0
    %441 = vmatpush1.msra.mxu0 0.0
    %442 = vmatprep.subr.mxu0 0.0
    %443 = vmatpush1.msra.mxu0 0.0
    %444 = vmatprep.subr.mxu0 0.0
    %445 = vmatpush1.msra.mxu0 0.0
    %446 = vmatprep.subr.mxu0 0.0
    %447 = vmatpush1.msra.mxu0 0.0
    %448 = vmatprep.subr.mxu0 0.0
    %449 = vmatpush1.msra.mxu0 0.0
    %450 = vmatprep.subr.mxu0 0.0
    %451 = vmatpush1.msra.mxu0 0.0
    %452 = vmatprep.subr.mxu0 0.0
    %453 = vmatpush1.msra.mxu0 0.0
    %454 = vmatprep.subr.mxu0 0.0
    %455 = vmatpush1.msra.mxu0 0.0
    %456 = vmatprep.subr.mxu0 0.0
    %457 = vmatpush1.msra.mxu0 0.0
    %458 = vmatprep.mubr.f32.mxu0 0.0
    %459 = vmatmul.mubr.f32.gmra.mrb[0].mxu0 %v370
    %v460 = vpop.f32.mrb[0].mxu0
    %v461 = vadd.f32 %v392, %v460
    %v462 = vpop.f32.mrb[0].mxu0
    %463 = vdwg.mxu0
    %464 = vst [vmem:[#allocation11] sm:$0xff] %v461
    // Predicated region
    $region46: #{tpu_custom_call.1} parent=1 // pred_check
      _
    $region47: #{tpu_custom_call.1} parent=1 // pred_check_branch
      %466 = sbr.rel (0) target = $region49
    $region48: #{tpu_custom_call.1} parent=1 // pred_region
      %s468 = ssub.s32 128, 128
      %469 = vsyncadd [#allocation5], %s468
      %s471 = sshll.u32 [#allocation11], 4
      %s472 = int_to_ptr.vmem [resolvable:$true] %s471
      %474 = dma.vmem_to_hbm [thread:$0]  %s472, 128, %s7, [#allocation5]
    $region49: #{tpu_custom_call.1} parent=1 // pred_fallthru
      _
    // Predicated region
    $region50: #{tpu_custom_call.1} parent=1 // pred_check
      _
    $region51: #{tpu_custom_call.1} parent=1 // pred_check_branch
      %476 = sbr.rel (0) target = $region53
    $region52: #{tpu_custom_call.1} parent=1 // pred_region
      %477 = dma.done [#allocation5], 128
    $region53: #{tpu_custom_call.1} parent=1 // pred_fallthru
      _
    %478 = vsyncpa [#allocation4], 1
    %479 = vsyncpa [#allocation7], 1
    %480 = vsyncpa [#allocation10], 1
    %481 = vsyncpa [#allocation5], 1

</llo_original>
